<compile_context>
chip_gen: v7x
topology: tpu7x:2x2x1
jax: 0.10.0
libtpu: 0.0.40
codegen_flags: <defaults>
</compile_context>

<pallas_src>
import functools

import jax
import jax.numpy as jnp
from jax.experimental import pallas as pl
from jax.experimental.pallas import tpu as pltpu

NEG_SLOPE = 0.01  # PyTorch nn.LeakyReLU default


def _leaky_relu(x):
    # For slope < 1, max(x, slope*x) == leaky_relu(x); mul+max instead of cmp+mul+select.
    return jnp.maximum(x, NEG_SLOPE * x)


def _round_up(x, m):
    return ((x + m - 1) // m) * m


def _decoder_kernel(x_ref, w1_ref, b1_ref, w2_ref, b2_ref, w3_ref, b3_ref, o_ref):
    # Fused 3x (matmul + bias + LeakyReLU) on one batch tile, f32 throughout.
    x = x_ref[...]

    h1 = jnp.dot(x, w1_ref[...], preferred_element_type=jnp.float32) + b1_ref[...]
    h1 = _leaky_relu(h1)

    h2 = jnp.dot(h1, w2_ref[...], preferred_element_type=jnp.float32) + b2_ref[...]
    h2 = _leaky_relu(h2)

    h3 = jnp.dot(h2, w3_ref[...], preferred_element_type=jnp.float32) + b3_ref[...]
    o_ref[...] = _leaky_relu(h3).astype(o_ref.dtype)


def _pick_block_b(B):
    """Batch-tile selection (f32 -> sublane multiple of 8).

    - B <= 2048: one grid step (grid is a serial loop; extra steps are pure
      per-step overhead at these tiny feature sizes).
    - 2048 < B <= 8192: exactly two tiles so a v7x megacore can put one on
      each TensorCore with balanced work.
    - Larger: 4096-row tiles (x tile 512 KB, out tile 384 KB -> far below every
      generation's scoped-VMEM limit even double-buffered).
    """
    if B <= 2048:
        return _round_up(B, 8)
    if B <= 8192:
        return _round_up(pl.cdiv(B, 2), 8)
    return 4096


@functools.partial(jax.jit, static_argnames=("output_size",))
def decoder_forward(x, params, output_size):
    """Pallas forward of SimpleVariationnalOutputBase.decoder.

    x: [B, latent_dim] float32
    params: dict with
        w1 [L, H4]  b1 [1, H4]
        w2 [H4, H2] b2 [1, H2]
        w3 [H2, O]  b3 [1, O]
    returns: [B, output_size] float32
    """
    w1, b1 = params["w1"], params["b1"]
    w2, b2 = params["w2"], params["b2"]
    w3, b3 = params["w3"], params["b3"]

    B, L = x.shape
    H4 = w1.shape[1]
    H2 = w2.shape[1]
    O = w3.shape[1]
    assert O == output_size

    # --- Batch tiling: pad B to the tile, no divisibility requirement. ---
    block_b = _pick_block_b(B)
    B_pad = _round_up(B, block_b)
    x_p = x if B_pad == B else jnp.pad(x, ((0, B_pad - B), (0, 0)))

    grid = (B_pad // block_b,)

    # Weights/biases are tiny: full block, resident across batch tiles.
    full = lambda shape: pl.BlockSpec(shape, lambda i: (0, 0))

    out = pl.pallas_call(
        _decoder_kernel,
        out_shape=jax.ShapeDtypeStruct((B_pad, O), jnp.float32),
        grid_spec=pl.GridSpec(
            grid=grid,
            in_specs=[
                pl.BlockSpec((block_b, L), lambda i: (i, 0)),  # x batch tile
                full((L, H4)),
                full((1, H4)),
                full((H4, H2)),
                full((1, H2)),
                full((H2, O)),
                full((1, O)),
            ],
            out_specs=pl.BlockSpec((block_b, O), lambda i: (i, 0)),
        ),
        compiler_params=pltpu.CompilerParams(
            dimension_semantics=("parallel",),  # independent batch tiles (v7x megacore)
        ),
    )(x_p, w1, b1, w2, b2, w3, b3)

    return out if B_pad == B else out[:B]


def init_params(key, latent_dim, hidden_dim, output_size):
    """Deterministic KaimingHeNormal-style init with kernel_gain=1.41, zero bias."""
    h4 = hidden_dim // 4
    h2 = hidden_dim // 2
    gain = 1.41

    def kaiming(k, fan_in, fan_out):
        std = gain * jnp.sqrt(2.0 / fan_in)
        return std * jax.random.normal(k, (fan_in, fan_out), dtype=jnp.float32)

    k1, k2, k3 = jax.random.split(key, 3)
    return {
        "w1": kaiming(k1, latent_dim, h4),
        "b1": jnp.zeros((1, h4), jnp.float32),
        "w2": kaiming(k2, h4, h2),
        "b2": jnp.zeros((1, h2), jnp.float32),
        "w3": kaiming(k3, h2, output_size),
        "b3": jnp.zeros((1, output_size), jnp.float32),
    }


def reference_forward_f32(x, params):
    """Pure-JAX f32 reference of the same MLP (HIGHEST precision dots)."""
    hp = jax.lax.Precision.HIGHEST

    def layer(h, w, b):
        return _leaky_relu(jnp.dot(h, w, precision=hp) + b)

    h = layer(x, params["w1"], params["b1"])
    h = layer(h, params["w2"], params["b2"])
    h = layer(h, params["w3"], params["b3"])
    return h


if __name__ == "__main__":
    # Small shapes consistent with the module's __init__:
    batch = 16
    latent_dim = 32
    hidden_dim = 64
    output_size = 24

    key = jax.random.PRNGKey(0)
    k_x, k_p = jax.random.split(key)

    x = jax.random.normal(k_x, (batch, latent_dim), dtype=jnp.float32)
    params = init_params(k_p, latent_dim, hidden_dim, output_size)

    out = decoder_forward(x, params, output_size)
    out = jax.block_until_ready(out)
    assert out.shape == (batch, output_size)

    # f32 kernel vs f32 reference: should agree to ~accumulation-order noise.
    ref = reference_forward_f32(x, params)
    assert jnp.allclose(out, ref, atol=5e-3, rtol=5e-3), "mismatch vs f32 reference"

    # get_joints_position / get_joints_velocity are trivial slices of the decoding:
    pos = out[:, : output_size // 2]
    vel = out[:, output_size // 2 :]
    assert pos.shape == (batch, output_size // 2)
    assert vel.shape == (batch, output_size // 2)

    print("KERNEL_OK")
</pallas_src>

<mosaic_0001>
module attributes {stable_mosaic.version = 11 : i64} {
  func.func @_decoder_kernel(%arg0: i32, %arg1: memref<16x32xf32, #tpu.memory_space<vmem>>, %arg2: memref<32x16xf32, #tpu.memory_space<vmem>>, %arg3: memref<1x16xf32, #tpu.memory_space<vmem>>, %arg4: memref<16x32xf32, #tpu.memory_space<vmem>>, %arg5: memref<1x32xf32, #tpu.memory_space<vmem>>, %arg6: memref<32x24xf32, #tpu.memory_space<vmem>>, %arg7: memref<1x24xf32, #tpu.memory_space<vmem>>, %arg8: memref<16x24xf32, #tpu.memory_space<vmem>>) attributes {dimension_semantics = [#tpu.dimension_semantics<parallel>], iteration_bounds = array<i64: 1>, scalar_prefetch = 0 : i64, scratch_operands = 0 : i64, tpu.core_type = #tpu.core_type<tc>, window_params = [{transform_indices = @transform_0, window_bounds = array<i64: 16, 32>}, {pipeline_mode = #tpu.pipeline_mode<synchronous>, transform_indices = @transform_1, window_bounds = array<i64: 32, 16>}, {pipeline_mode = #tpu.pipeline_mode<synchronous>, transform_indices = @transform_2, window_bounds = array<i64: 1, 16>}, {pipeline_mode = #tpu.pipeline_mode<synchronous>, transform_indices = @transform_3, window_bounds = array<i64: 16, 32>}, {pipeline_mode = #tpu.pipeline_mode<synchronous>, transform_indices = @transform_4, window_bounds = array<i64: 1, 32>}, {pipeline_mode = #tpu.pipeline_mode<synchronous>, transform_indices = @transform_5, window_bounds = array<i64: 32, 24>}, {pipeline_mode = #tpu.pipeline_mode<synchronous>, transform_indices = @transform_6, window_bounds = array<i64: 1, 24>}, {transform_indices = @transform_7, window_bounds = array<i64: 16, 24>}]} {
    %c0 = arith.constant 0 : index
    %c0_0 = arith.constant 0 : index
    %0 = vector.load %arg1[%c0, %c0_0] : memref<16x32xf32, #tpu.memory_space<vmem>>, vector<16x32xf32>
    %c0_1 = arith.constant 0 : index
    %c0_2 = arith.constant 0 : index
    %1 = vector.load %arg2[%c0_1, %c0_2] : memref<32x16xf32, #tpu.memory_space<vmem>>, vector<32x16xf32>
    %cst = arith.constant dense<0.000000e+00> : vector<16x16xf32>
    %2 = tpu.matmul %0, %1, %cst {dimension_numbers = #tpu.dot_dimension_numbers<[1], [0], [0], [1], [0, 0, 1, 1], [], []>} : vector<16x32xf32>, vector<32x16xf32>, vector<16x16xf32> -> vector<16x16xf32>
    %c0_3 = arith.constant 0 : index
    %c0_4 = arith.constant 0 : index
    %3 = vector.load %arg3[%c0_3, %c0_4] : memref<1x16xf32, #tpu.memory_space<vmem>>, vector<1x16xf32>
    %4 = vector.broadcast %3 : vector<1x16xf32> to vector<16x16xf32>
    %5 = arith.addf %2, %4 : vector<16x16xf32>
    %cst_5 = arith.constant 0.00999999977 : f32
    %6 = vector.broadcast %cst_5 : f32 to vector<16x16xf32>
    %7 = arith.mulf %6, %5 : vector<16x16xf32>
    %8 = arith.maximumf %5, %7 : vector<16x16xf32>
    %c0_6 = arith.constant 0 : index
    %c0_7 = arith.constant 0 : index
    %9 = vector.load %arg4[%c0_6, %c0_7] : memref<16x32xf32, #tpu.memory_space<vmem>>, vector<16x32xf32>
    %cst_8 = arith.constant dense<0.000000e+00> : vector<16x32xf32>
    %10 = tpu.matmul %8, %9, %cst_8 {dimension_numbers = #tpu.dot_dimension_numbers<[1], [0], [0], [1], [0, 0, 1, 1], [], []>} : vector<16x16xf32>, vector<16x32xf32>, vector<16x32xf32> -> vector<16x32xf32>
    %c0_9 = arith.constant 0 : index
    %c0_10 = arith.constant 0 : index
    %11 = vector.load %arg5[%c0_9, %c0_10] : memref<1x32xf32, #tpu.memory_space<vmem>>, vector<1x32xf32>
    %12 = vector.broadcast %11 : vector<1x32xf32> to vector<16x32xf32>
    %13 = arith.addf %10, %12 : vector<16x32xf32>
    %cst_11 = arith.constant 0.00999999977 : f32
    %14 = vector.broadcast %cst_11 : f32 to vector<16x32xf32>
    %15 = arith.mulf %14, %13 : vector<16x32xf32>
    %16 = arith.maximumf %13, %15 : vector<16x32xf32>
    %c0_12 = arith.constant 0 : index
    %c0_13 = arith.constant 0 : index
    %17 = vector.load %arg6[%c0_12, %c0_13] : memref<32x24xf32, #tpu.memory_space<vmem>>, vector<32x24xf32>
    %cst_14 = arith.constant dense<0.000000e+00> : vector<16x24xf32>
    %18 = tpu.matmul %16, %17, %cst_14 {dimension_numbers = #tpu.dot_dimension_numbers<[1], [0], [0], [1], [0, 0, 1, 1], [], []>} : vector<16x32xf32>, vector<32x24xf32>, vector<16x24xf32> -> vector<16x24xf32>
    %c0_15 = arith.constant 0 : index
    %c0_16 = arith.constant 0 : index
    %19 = vector.load %arg7[%c0_15, %c0_16] : memref<1x24xf32, #tpu.memory_space<vmem>>, vector<1x24xf32>
    %20 = vector.broadcast %19 : vector<1x24xf32> to vector<16x24xf32>
    %21 = arith.addf %18, %20 : vector<16x24xf32>
    %cst_17 = arith.constant 0.00999999977 : f32
    %22 = vector.broadcast %cst_17 : f32 to vector<16x24xf32>
    %23 = arith.mulf %22, %21 : vector<16x24xf32>
    %24 = arith.maximumf %21, %23 : vector<16x24xf32>
    %c0_18 = arith.constant 0 : index
    %c0_19 = arith.constant 0 : index
    %25 = vector.load %arg8[%c0_18, %c0_19] : memref<16x24xf32, #tpu.memory_space<vmem>>, vector<16x24xf32>
    tpu.vector_store %arg8[%c0_18, %c0_19], %24 {strides = array<i32>} : memref<16x24xf32, #tpu.memory_space<vmem>>, vector<16x24xf32>,
    return
  }
  func.func @transform_0(%arg0: i32) -> (i32, i32) {
    %c0_i32 = arith.constant 0 : i32
    %c0_i32_0 = arith.constant 0 : i32
    return %arg0, %c0_i32 : i32, i32
  }
  func.func @transform_1(%arg0: i32) -> (i32, i32) {
    %c0_i32 = arith.constant 0 : i32
    %c0_i32_0 = arith.constant 0 : i32
    %c0_i32_1 = arith.constant 0 : i32
    return %c0_i32, %c0_i32_0 : i32, i32
  }
  func.func @transform_2(%arg0: i32) -> (i32, i32) {
    %c0_i32 = arith.constant 0 : i32
    %c0_i32_0 = arith.constant 0 : i32
    %c0_i32_1 = arith.constant 0 : i32
    return %c0_i32, %c0_i32_0 : i32, i32
  }
  func.func @transform_3(%arg0: i32) -> (i32, i32) {
    %c0_i32 = arith.constant 0 : i32
    %c0_i32_0 = arith.constant 0 : i32
    %c0_i32_1 = arith.constant 0 : i32
    return %c0_i32, %c0_i32_0 : i32, i32
  }
  func.func @transform_4(%arg0: i32) -> (i32, i32) {
    %c0_i32 = arith.constant 0 : i32
    %c0_i32_0 = arith.constant 0 : i32
    %c0_i32_1 = arith.constant 0 : i32
    return %c0_i32, %c0_i32_0 : i32, i32
  }
  func.func @transform_5(%arg0: i32) -> (i32, i32) {
    %c0_i32 = arith.constant 0 : i32
    %c0_i32_0 = arith.constant 0 : i32
    %c0_i32_1 = arith.constant 0 : i32
    return %c0_i32, %c0_i32_0 : i32, i32
  }
  func.func @transform_6(%arg0: i32) -> (i32, i32) {
    %c0_i32 = arith.constant 0 : i32
    %c0_i32_0 = arith.constant 0 : i32
    %c0_i32_1 = arith.constant 0 : i32
    return %c0_i32, %c0_i32_0 : i32, i32
  }
  func.func @transform_7(%arg0: i32) -> (i32, i32) {
    %c0_i32 = arith.constant 0 : i32
    %c0_i32_0 = arith.constant 0 : i32
    return %arg0, %c0_i32 : i32, i32
  }
}

</mosaic_0001>

<llo_original>
// kernel: decoder_forward.1
$region0: #{decoder_forward.1}
  #allocation0 [shape = 'u32[]', space=smem, size = 0x4, offset = 0x4, fixed_abs, tag = 'smem constant byte address 0x4 - core index']
  #allocation1 [shape = 'u32[144,128]{1,0:T(1,128)}', space=vmem, size = 0x12000, scoped, tag = 'internal scratch']
  %s0 = inlined_call_operand.vmem [shape: f32[16,32], index: 0, kind: input, shape index: {}]
  %s1 = inlined_call_operand.vmem [shape: f32[32,16], index: 1, kind: input, shape index: {}]
  %s2 = inlined_call_operand.vmem [shape: f32[1,16], index: 2, kind: input, shape index: {}]
  %s3 = inlined_call_operand.vmem [shape: f32[16,32], index: 3, kind: input, shape index: {}]
  %s4 = inlined_call_operand.vmem [shape: f32[1,32], index: 4, kind: input, shape index: {}]
  %s5 = inlined_call_operand.vmem [shape: f32[32,24], index: 5, kind: input, shape index: {}]
  %s6 = inlined_call_operand.vmem [shape: f32[1,24], index: 6, kind: input, shape index: {}]
  %s7 = inlined_call_operand.hbm [shape: f32[16,24], index: 7, kind: output, shape index: {}]
  %s8 = sld [smem:[#allocation0]]
  $region38: #{decoder_forward.1} parent=0
    _
  %s10 = ssub.s32 1, %s8
  %s11 = scalar_select 0, %s10, %s8
  $region1: #{decoder_forward.1} parent=0
    #allocation2 [shape = 'u8[8192]{0}', space=vmem, size = 0x2000, scoped, tag = 'output window, operand 0, single buffered']
    #allocation3 [shape = 's32[1]{0}', space=sflag, size = 0x4, scoped, tag = 'scoped memory for decoder_forward.1']
    %12 = vsyncpa [#allocation3], 0
    // Predicated region
    $region2: #{decoder_forward.1} parent=1 // pred_check
      _
    $region3: #{decoder_forward.1} parent=1 // pred_check_branch
      %14 = sbr.rel (0) target = $region5
    $region4: #{decoder_forward.1} parent=1 // pred_region
      _
    $region5: #{decoder_forward.1} parent=1 // pred_fallthru
      _
    // Predicated region
    $region6: #{decoder_forward.1} parent=1 // pred_check
      _
    $region7: #{decoder_forward.1} parent=1 // pred_check_branch
      %16 = sbr.rel (0) target = $region9
    $region8: #{decoder_forward.1} parent=1 // pred_region
      _
    $region9: #{decoder_forward.1} parent=1 // pred_fallthru
      _
    // Predicated region
    $region10: #{decoder_forward.1} parent=1 // pred_check
      _
    $region11: #{decoder_forward.1} parent=1 // pred_check_branch
      %18 = sbr.rel (0) target = $region13
    $region12: #{decoder_forward.1} parent=1 // pred_region
      _
    $region13: #{decoder_forward.1} parent=1 // pred_fallthru
      _
    // Predicated region
    $region14: #{decoder_forward.1} parent=1 // pred_check
      _
    $region15: #{decoder_forward.1} parent=1 // pred_check_branch
      %20 = sbr.rel (0) target = $region17
    $region16: #{decoder_forward.1} parent=1 // pred_region
      _
    $region17: #{decoder_forward.1} parent=1 // pred_fallthru
      _
    // Predicated region
    $region18: #{decoder_forward.1} parent=1 // pred_check
      _
    $region19: #{decoder_forward.1} parent=1 // pred_check_branch
      %22 = sbr.rel (0) target = $region21
    $region20: #{decoder_forward.1} parent=1 // pred_region
      _
    $region21: #{decoder_forward.1} parent=1 // pred_fallthru
      _
    // Predicated region
    $region22: #{decoder_forward.1} parent=1 // pred_check
      _
    $region23: #{decoder_forward.1} parent=1 // pred_check_branch
      %24 = sbr.rel (0) target = $region25
    $region24: #{decoder_forward.1} parent=1 // pred_region
      _
    $region25: #{decoder_forward.1} parent=1 // pred_fallthru
      _
    // Predicated region
    $region26: #{decoder_forward.1} parent=1 // pred_check
      _
    $region27: #{decoder_forward.1} parent=1 // pred_check_branch
      %26 = sbr.rel (0) target = $region29
    $region28: #{decoder_forward.1} parent=1 // pred_region
      _
    $region29: #{decoder_forward.1} parent=1 // pred_fallthru
      _
    %v27 = vld [vmem:[%s0] sm:$0xff]
    %v28 = vld [vmem:[%s0 + $0x8] sm:$0xff]
    %v29 = vld [vmem:[%s1] sm:$0xff]
    %v30 = vld [vmem:[%s1 + $0x8] sm:$0xff]
    %v31 = vld [vmem:[%s1 + $0x10] sm:$0xff]
    %v32 = vld [vmem:[%s1 + $0x18] sm:$0xff]
    %v33 = vld [vmem:[%s2] sm:$0x1]
    %v35 = vlaneseq
    %v36 = vshrl.u32 %v35, 7
    %v37 = vsub.s32 0, %v36
    %v38 = vrot.slane %v33, %v37
    %vm40 = vcmask 261120
    %v42 = vsel %vm40, %v27, 0
    %v45 = vsel %vm40, %v28, 0
    %47 = vmatprep.subr.mxu0 0.0
    %48 = vmatpush1.msra.mxu0 %v29
    %49 = vmatprep.subr.mxu0 0.0
    %50 = vmatpush1.msra.mxu0 %v30
    %51 = vmatprep.subr.mxu0 0.0
    %52 = vmatpush1.msra.mxu0 %v31
    %53 = vmatprep.subr.mxu0 0.0
    %54 = vmatpush1.msra.mxu0 %v32
    %55 = vmatprep.subr.mxu0 0.0
    %56 = vmatpush1.msra.mxu0 0.0
    %57 = vmatprep.subr.mxu0 0.0
    %58 = vmatpush1.msra.mxu0 0.0
    %59 = vmatprep.subr.mxu0 0.0
    %60 = vmatpush1.msra.mxu0 0.0
    %61 = vmatprep.subr.mxu0 0.0
    %62 = vmatpush1.msra.mxu0 0.0
    %63 = vmatprep.subr.mxu0 0.0
    %64 = vmatpush1.msra.mxu0 0.0
    %65 = vmatprep.subr.mxu0 0.0
    %66 = vmatpush1.msra.mxu0 0.0
    %67 = vmatprep.subr.mxu0 0.0
    %68 = vmatpush1.msra.mxu0 0.0
    %69 = vmatprep.subr.mxu0 0.0
    %70 = vmatpush1.msra.mxu0 0.0
    %71 = vmatprep.subr.mxu0 0.0
    %72 = vmatpush1.msra.mxu0 0.0
    %73 = vmatprep.subr.mxu0 0.0
    %74 = vmatpush1.msra.mxu0 0.0
    %75 = vmatprep.subr.mxu0 0.0
    %76 = vmatpush1.msra.mxu0 0.0
    %77 = vmatprep.subr.mxu0 0.0
    %78 = vmatpush1.msra.mxu0 0.0
    %79 = vmatprep.subr.mxu0 0.0
    %80 = vmatpush1.msra.mxu0 0.0
    %81 = vmatprep.subr.mxu0 0.0
    %82 = vmatpush1.msra.mxu0 0.0
    %83 = vmatprep.subr.mxu0 0.0
    %84 = vmatpush1.msra.mxu0 0.0
    %85 = vmatprep.subr.mxu0 0.0
    %86 = vmatpush1.msra.mxu0 0.0
    %87 = vmatprep.subr.mxu0 0.0
    %88 = vmatpush1.msra.mxu0 0.0
    %89 = vmatprep.subr.mxu0 0.0
    %90 = vmatpush1.msra.mxu0 0.0
    %91 = vmatprep.subr.mxu0 0.0
    %92 = vmatpush1.msra.mxu0 0.0
    %93 = vmatprep.subr.mxu0 0.0
    %94 = vmatpush1.msra.mxu0 0.0
    %95 = vmatprep.subr.mxu0 0.0
    %96 = vmatpush1.msra.mxu0 0.0
    %97 = vmatprep.subr.mxu0 0.0
    %98 = vmatpush1.msra.mxu0 0.0
    %99 = vmatprep.subr.mxu0 0.0
    %100 = vmatpush1.msra.mxu0 0.0
    %101 = vmatprep.subr.mxu0 0.0
    %102 = vmatpush1.msra.mxu0 0.0
    %103 = vmatprep.subr.mxu0 0.0
    %104 = vmatpush1.msra.mxu0 0.0
    %105 = vmatprep.subr.mxu0 0.0
    %106 = vmatpush1.msra.mxu0 0.0
    %107 = vmatprep.subr.mxu0 0.0
    %108 = vmatpush1.msra.mxu0 0.0
    %109 = vmatprep.subr.mxu0 0.0
    %110 = vmatpush1.msra.mxu0 0.0
    %111 = vmatprep.mubr.f32.mxu0 0.0
    %112 = vmatmul.mubr.f32.gmra.mrb[0].mxu0 %v42
    %v113 = vpop.f32.mrb[0].mxu0
    %v114 = vadd.f32 %v38, %v113
    %v115 = vpop.f32.mrb[0].mxu0
    %116 = vmatprep.mubr.f32.mxu0 0.0
    %117 = vmatmul.mubr.f32.gmra.mrb[0].mxu0 %v45
    %v118 = vpop.f32.mrb[0].mxu0
    %v119 = vadd.f32 %v38, %v118
    %v120 = vpop.f32.mrb[0].mxu0
    %121 = vdwg.mxu0
    %v122 = vmul.f32 %v114, 0.01
    %v123 = vmul.f32 %v119, 0.01
    %v124 = vmax.f32 %v114, %v122
    %v125 = vmax.f32 %v119, %v123
    %v126 = vld [vmem:[%s3] sm:$0xff]
    %v127 = vld [vmem:[%s3 + $0x8] sm:$0xff]
    %v128 = vld [vmem:[%s4] sm:$0x1]
    %v130 = vlaneseq
    %v131 = vshrl.u32 %v130, 7
    %v132 = vsub.s32 0, %v131
    %v133 = vrot.slane %v128, %v132
    %vm135 = vcmask 130048
    %v137 = vsel %vm135, %v124, 0
    %v140 = vsel %vm135, %v125, 0
    %142 = vmatprep.subr.mxu0 0.0
    %143 = vmatpush1.msra.mxu0 %v126
    %144 = vmatprep.subr.mxu0 0.0
    %145 = vmatpush1.msra.mxu0 %v127
    %146 = vmatprep.subr.mxu0 0.0
    %147 = vmatpush1.msra.mxu0 0.0
    %148 = vmatprep.subr.mxu0 0.0
    %149 = vmatpush1.msra.mxu0 0.0
    %150 = vmatprep.subr.mxu0 0.0
    %151 = vmatpush1.msra.mxu0 0.0
    %152 = vmatprep.subr.mxu0 0.0
    %153 = vmatpush1.msra.mxu0 0.0
    %154 = vmatprep.subr.mxu0 0.0
    %155 = vmatpush1.msra.mxu0 0.0
    %156 = vmatprep.subr.mxu0 0.0
    %157 = vmatpush1.msra.mxu0 0.0
    %158 = vmatprep.subr.mxu0 0.0
    %159 = vmatpush1.msra.mxu0 0.0
    %160 = vmatprep.subr.mxu0 0.0
    %161 = vmatpush1.msra.mxu0 0.0
    %162 = vmatprep.subr.mxu0 0.0
    %163 = vmatpush1.msra.mxu0 0.0
    %164 = vmatprep.subr.mxu0 0.0
    %165 = vmatpush1.msra.mxu0 0.0
    %166 = vmatprep.subr.mxu0 0.0
    %167 = vmatpush1.msra.mxu0 0.0
    %168 = vmatprep.subr.mxu0 0.0
    %169 = vmatpush1.msra.mxu0 0.0
    %170 = vmatprep.subr.mxu0 0.0
    %171 = vmatpush1.msra.mxu0 0.0
    %172 = vmatprep.subr.mxu0 0.0
    %173 = vmatpush1.msra.mxu0 0.0
    %174 = vmatprep.subr.mxu0 0.0
    %175 = vmatpush1.msra.mxu0 0.0
    %176 = vmatprep.subr.mxu0 0.0
    %177 = vmatpush1.msra.mxu0 0.0
    %178 = vmatprep.subr.mxu0 0.0
    %179 = vmatpush1.msra.mxu0 0.0
    %180 = vmatprep.subr.mxu0 0.0
    %181 = vmatpush1.msra.mxu0 0.0
    %182 = vmatprep.subr.mxu0 0.0
    %183 = vmatpush1.msra.mxu0 0.0
    %184 = vmatprep.subr.mxu0 0.0
    %185 = vmatpush1.msra.mxu0 0.0
    %186 = vmatprep.subr.mxu0 0.0
    %187 = vmatpush1.msra.mxu0 0.0
    %188 = vmatprep.subr.mxu0 0.0
    %189 = vmatpush1.msra.mxu0 0.0
    %190 = vmatprep.subr.mxu0 0.0
    %191 = vmatpush1.msra.mxu0 0.0
    %192 = vmatprep.subr.mxu0 0.0
    %193 = vmatpush1.msra.mxu0 0.0
    %194 = vmatprep.subr.mxu0 0.0
    %195 = vmatpush1.msra.mxu0 0.0
    %196 = vmatprep.subr.mxu0 0.0
    %197 = vmatpush1.msra.mxu0 0.0
    %198 = vmatprep.subr.mxu0 0.0
    %199 = vmatpush1.msra.mxu0 0.0
    %200 = vmatprep.subr.mxu0 0.0
    %201 = vmatpush1.msra.mxu0 0.0
    %202 = vmatprep.subr.mxu0 0.0
    %203 = vmatpush1.msra.mxu0 0.0
    %204 = vmatprep.subr.mxu0 0.0
    %205 = vmatpush1.msra.mxu0 0.0
    %206 = vmatprep.mubr.f32.mxu0 0.0
    %207 = vmatmul.mubr.f32.gmra.mrb[0].mxu0 %v137
    %v208 = vpop.f32.mrb[0].mxu0
    %v209 = vadd.f32 %v133, %v208
    %v210 = vpop.f32.mrb[0].mxu0
    %211 = vmatprep.mubr.f32.mxu0 0.0
    %212 = vmatmul.mubr.f32.gmra.mrb[0].mxu0 %v140
    %v213 = vpop.f32.mrb[0].mxu0
    %v214 = vadd.f32 %v133, %v213
    %v215 = vpop.f32.mrb[0].mxu0
    %216 = vdwg.mxu0
    %v217 = vmul.f32 %v209, 0.01
    %v218 = vmul.f32 %v214, 0.01
    %v219 = vmax.f32 %v209, %v217
    %v220 = vmax.f32 %v214, %v218
    %v221 = vld [vmem:[%s5] sm:$0xff]
    %v222 = vld [vmem:[%s5 + $0x8] sm:$0xff]
    %v223 = vld [vmem:[%s5 + $0x10] sm:$0xff]
    %v224 = vld [vmem:[%s5 + $0x18] sm:$0xff]
    %v225 = vld [vmem:[%s6] sm:$0x1]
    %v227 = vlaneseq
    %v228 = vshrl.u32 %v227, 7
    %v229 = vsub.s32 0, %v228
    %v230 = vrot.slane %v225, %v229
    %v233 = vsel %vm40, %v219, 0
    %v236 = vsel %vm40, %v220, 0
    %238 = vmatprep.subr.mxu0 0.0
    %239 = vmatpush1.msra.mxu0 %v221
    %240 = vmatprep.subr.mxu0 0.0
    %241 = vmatpush1.msra.mxu0 %v222
    %242 = vmatprep.subr.mxu0 0.0
    %243 = vmatpush1.msra.mxu0 %v223
    %244 = vmatprep.subr.mxu0 0.0
    %245 = vmatpush1.msra.mxu0 %v224
    %246 = vmatprep.subr.mxu0 0.0
    %247 = vmatpush1.msra.mxu0 0.0
    %248 = vmatprep.subr.mxu0 0.0
    %249 = vmatpush1.msra.mxu0 0.0
    %250 = vmatprep.subr.mxu0 0.0
    %251 = vmatpush1.msra.mxu0 0.0
    %252 = vmatprep.subr.mxu0 0.0
    %253 = vmatpush1.msra.mxu0 0.0
    %254 = vmatprep.subr.mxu0 0.0
    %255 = vmatpush1.msra.mxu0 0.0
    %256 = vmatprep.subr.mxu0 0.0
    %257 = vmatpush1.msra.mxu0 0.0
    %258 = vmatprep.subr.mxu0 0.0
    %259 = vmatpush1.msra.mxu0 0.0
    %260 = vmatprep.subr.mxu0 0.0
    %261 = vmatpush1.msra.mxu0 0.0
    %262 = vmatprep.subr.mxu0 0.0
    %263 = vmatpush1.msra.mxu0 0.0
    %264 = vmatprep.subr.mxu0 0.0
    %265 = vmatpush1.msra.mxu0 0.0
    %266 = vmatprep.subr.mxu0 0.0
    %267 = vmatpush1.msra.mxu0 0.0
    %268 = vmatprep.subr.mxu0 0.0
    %269 = vmatpush1.msra.mxu0 0.0
    %270 = vmatprep.subr.mxu0 0.0
    %271 = vmatpush1.msra.mxu0 0.0
    %272 = vmatprep.subr.mxu0 0.0
    %273 = vmatpush1.msra.mxu0 0.0
    %274 = vmatprep.subr.mxu0 0.0
    %275 = vmatpush1.msra.mxu0 0.0
    %276 = vmatprep.subr.mxu0 0.0
    %277 = vmatpush1.msra.mxu0 0.0
    %278 = vmatprep.subr.mxu0 0.0
    %279 = vmatpush1.msra.mxu0 0.0
    %280 = vmatprep.subr.mxu0 0.0
    %281 = vmatpush1.msra.mxu0 0.0
    %282 = vmatprep.subr.mxu0 0.0
    %283 = vmatpush1.msra.mxu0 0.0
    %284 = vmatprep.subr.mxu0 0.0
    %285 = vmatpush1.msra.mxu0 0.0
    %286 = vmatprep.subr.mxu0 0.0
    %287 = vmatpush1.msra.mxu0 0.0
    %288 = vmatprep.subr.mxu0 0.0
    %289 = vmatpush1.msra.mxu0 0.0
    %290 = vmatprep.subr.mxu0 0.0
    %291 = vmatpush1.msra.mxu0 0.0
    %292 = vmatprep.subr.mxu0 0.0
    %293 = vmatpush1.msra.mxu0 0.0
    %294 = vmatprep.subr.mxu0 0.0
    %295 = vmatpush1.msra.mxu0 0.0
    %296 = vmatprep.subr.mxu0 0.0
    %297 = vmatpush1.msra.mxu0 0.0
    %298 = vmatprep.subr.mxu0 0.0
    %299 = vmatpush1.msra.mxu0 0.0
    %300 = vmatprep.subr.mxu0 0.0
    %301 = vmatpush1.msra.mxu0 0.0
    %302 = vmatprep.mubr.f32.mxu0 0.0
    %303 = vmatmul.mubr.f32.gmra.mrb[0].mxu0 %v233
    %v304 = vpop.f32.mrb[0].mxu0
    %v305 = vadd.f32 %v230, %v304
    %v306 = vpop.f32.mrb[0].mxu0
    %307 = vmatprep.mubr.f32.mxu0 0.0
    %308 = vmatmul.mubr.f32.gmra.mrb[0].mxu0 %v236
    %v309 = vpop.f32.mrb[0].mxu0
    %v310 = vadd.f32 %v230, %v309
    %v311 = vpop.f32.mrb[0].mxu0
    %312 = vdwg.mxu0
    %v313 = vmul.f32 %v305, 0.01
    %v314 = vmul.f32 %v310, 0.01
    %v315 = vmax.f32 %v305, %v313
    %v316 = vmax.f32 %v310, %v314
    %vm317 = vcmask 195584
    %318 = vst.msk [vmem:[#allocation2] sm:$0xff] %vm317, %v315
    %319 = vst.msk [vmem:[#allocation2 + $0x8] sm:$0xff] %vm317, %v316
    // Predicated region
    $region30: #{decoder_forward.1} parent=1 // pred_check
      _
    $region31: #{decoder_forward.1} parent=1 // pred_check_branch
      %321 = sbr.rel (0) target = $region33
    $region32: #{decoder_forward.1} parent=1 // pred_region
      %s323 = ssub.s32 256, 256
      %324 = vsyncadd [#allocation3], %s323
      %s325 = sshll.u32 [#allocation2], 4
      %s326 = int_to_ptr.vmem [resolvable:$true] %s325
      %331 = dma.vmem_to_hbm [thread:$0]  %s326, 256, %s7, [#allocation3], 128, 128, 8
    $region33: #{decoder_forward.1} parent=1 // pred_fallthru
      _
    // Predicated region
    $region34: #{decoder_forward.1} parent=1 // pred_check
      _
    $region35: #{decoder_forward.1} parent=1 // pred_check_branch
      %333 = sbr.rel (0) target = $region37
    $region36: #{decoder_forward.1} parent=1 // pred_region
      %334 = dma.done [#allocation3], 256
    $region37: #{decoder_forward.1} parent=1 // pred_fallthru
      _
    %335 = vsyncpa [#allocation3], 1

</llo_original>
